<compile_context>
chip_gen: v7x
topology: tpu7x:2x2x1
jax: 0.10.0
libtpu: 0.0.40
codegen_flags: <defaults>
</compile_context>

<pallas_src>
import jax
import jax.numpy as jnp
from jax.experimental import pallas as pl
from jax.experimental.pallas import tpu as pltpu


def _round_up(n: int, m: int) -> int:
    return ((n + m - 1) // m) * m


# --------------------------------------------------------------------------------------
# Kernel
# --------------------------------------------------------------------------------------
def _make_gating_kernel(od_pad, ld_pad, H, HH, E, bias_offsets, split_l2):
    off_b1, off_b2, off_tb2, off_b3 = bias_offsets  # static Python ints (128-aligned)

    def kernel(obs_ref, lat_ref, w1_ref, *rest):
        if split_l2:
            w2_ref, tw2_ref, w3_ref, b_ref, out_ref = rest
        else:
            w2b_ref, w3_ref, b_ref, out_ref = rest

        # Packed biases: static, 128-lane-aligned slices of one resident VMEM vector (f32).
        b1 = b_ref[:, off_b1:off_b1 + 2 * H]       # [1, 2H]  = b1 ‖ tb1
        b2 = b_ref[:, off_b2:off_b2 + H]           # [1, H]
        tb2 = b_ref[:, off_tb2:off_tb2 + HH]       # [1, HH]
        b3 = b_ref[:, off_b3:off_b3 + E]           # [1, E]

        # Fused layer 1 for both heads, concat-free:
        #   [h1 | t1] = obs @ W1f[:od_pad] + latent @ W1f[od_pad:] + (b1 ‖ tb1)
        # The row split point is padded to a multiple of 8 rows at pack time, so both
        # slices are sublane-aligned views (no per-step VMEM copy).
        h = (jnp.dot(obs_ref[...], w1_ref[0:od_pad, :],
                     preferred_element_type=jnp.float32)
             + jnp.dot(lat_ref[...], w1_ref[od_pad:od_pad + ld_pad, :],
                       preferred_element_type=jnp.float32)
             + b1)
        h = jnp.maximum(h, 0.0)                    # [B, 2H] = relu(h1) ‖ relu(t1), f32

        if split_l2:
            # H % 128 == 0: the h split is lane-aligned -> two dense dots avoid the
            # zero-padded block-diagonal weight (half the layer-2 MXU work / DMA).
            hd = h.astype(w2_ref.dtype)
            h2 = jnp.maximum(
                jnp.dot(hd[:, 0:H], w2_ref[...],
                        preferred_element_type=jnp.float32) + b2, 0.0)        # [B, H]
            emb = (jnp.dot(hd[:, H:2 * H], tw2_ref[...],
                           preferred_element_type=jnp.float32) + tb2)          # [B, HH]
        else:
            # Tiny H: one block-diagonal MXU pass beats two small dots.
            s2 = jnp.dot(h.astype(w2b_ref.dtype), w2b_ref[...],
                         preferred_element_type=jnp.float32)                   # [B, H+HH]
            h2 = jnp.maximum(s2[:, 0:H] + b2, 0.0)
            emb = s2[:, H:H + HH] + tb2

        # attention_net layer 3 + numerically stable, exactly normalized softmax.
        logits = jnp.dot(h2.astype(w3_ref.dtype), w3_ref[...],
                         preferred_element_type=jnp.float32) + b3
        m = jnp.max(logits, axis=-1, keepdims=True)
        e = jnp.exp(logits - m)
        attn = e / jnp.sum(e, axis=-1, keepdims=True)

        # Single packed, lane-dense output store: [attn | emb].
        out_ref[...] = jnp.concatenate([attn, emb], axis=-1).astype(out_ref.dtype)

    return kernel


# --------------------------------------------------------------------------------------
# Wrapper
# --------------------------------------------------------------------------------------
def attention_gating_forward(obs, latent, packed, *, max_block_batch=2048):
    """obs: [B, obs_dim], latent: [B, latent_dim].

    Returns (attention_weights [B, num_experts], task_embedding [B, hidden//2]).
    """
    H, HH, E = packed["hidden"], packed["half_hidden"], packed["num_experts"]
    od, ld = packed["obs_dim"], packed["latent_dim"]
    od_pad, ld_pad = packed["od_pad"], packed["ld_pad"]
    assert obs.shape[1] == od and latent.shape[1] == ld
    B = obs.shape[0]
    compute_dtype = packed["w1_fused"].dtype

    # Batch tiling: big tiles amortize the ~0.35 us/step grid overhead (per-step VMEM at
    # TB=2048 is <2 MiB, far below even v7x's scoped limit).  Keep >=2 grid steps whenever
    # the batch allows so ("parallel",) can shard across both v7x TensorCores.
    B8 = _round_up(B, 8)
    TB = min(max_block_batch, B8)
    if B8 > 8:
        TB = min(TB, _round_up((B8 + 1) // 2, 8))
    B_pad = _round_up(B, TB)

    # Zero-pad batch and feature dims (padded rows stay finite through exp/softmax) and
    # cast activations to the storage dtype (bf16 halves input DMA on v6e/v7x; the
    # elementwise path inside the kernel stays f32, which keeps v5e happy).
    obs_p = jnp.zeros((B_pad, od_pad), compute_dtype).at[:B, :od].set(
        obs.astype(compute_dtype))
    lat_p = jnp.zeros((B_pad, ld_pad), compute_dtype).at[:B, :ld].set(
        latent.astype(compute_dtype))

    kernel = _make_gating_kernel(od_pad, ld_pad, H, HH, E,
                                 packed["bias_offsets"], packed["split_l2"])

    def resident(a):  # full-array block, resident across the batch grid axis
        return pl.BlockSpec(a.shape, lambda i: (0, 0))

    weight_ops = [packed["w1_fused"]]
    weight_specs = [resident(packed["w1_fused"])]
    if packed["split_l2"]:
        weight_ops += [packed["w2"], packed["tw2"]]
        weight_specs += [resident(packed["w2"]), resident(packed["tw2"])]
    else:
        weight_ops += [packed["w2_block"]]
        weight_specs += [resident(packed["w2_block"])]
    weight_ops += [packed["w3"], packed["bias_pack"]]
    weight_specs += [resident(packed["w3"]), resident(packed["bias_pack"])]

    out = pl.pallas_call(
        kernel,
        out_shape=jax.ShapeDtypeStruct((B_pad, E + HH), jnp.float32),
        grid=(B_pad // TB,),
        in_specs=[pl.BlockSpec((TB, od_pad), lambda i: (i, 0)),
                  pl.BlockSpec((TB, ld_pad), lambda i: (i, 0))] + weight_specs,
        out_specs=pl.BlockSpec((TB, E + HH), lambda i: (i, 0)),
        compiler_params=pltpu.CompilerParams(dimension_semantics=("parallel",)),
    )(obs_p, lat_p, *weight_ops)

    out = out[:B]
    return out[:, :E], out[:, E:]


# --------------------------------------------------------------------------------------
# Parameter construction / packing
# --------------------------------------------------------------------------------------
def init_params(key, input_dim, num_experts, hidden_dim):
    """Synthetic init mimicking nn.Linear shapes (weights stored as [in, out], f32)."""
    ks = jax.random.split(key, 10)

    def lin(k_w, k_b, fan_in, fan_out):
        bound = 1.0 / jnp.sqrt(fan_in)
        w = jax.random.uniform(k_w, (fan_in, fan_out), jnp.float32, -bound, bound)
        b = jax.random.uniform(k_b, (1, fan_out), jnp.float32, -bound, bound)
        return w, b

    w1, b1 = lin(ks[0], ks[1], input_dim, hidden_dim)
    w2, b2 = lin(ks[2], ks[3], hidden_dim, hidden_dim)
    w3, b3 = lin(ks[4], ks[5], hidden_dim, num_experts)
    tw1, tb1 = lin(ks[6], ks[7], input_dim, hidden_dim)
    tw2, tb2 = lin(ks[8], ks[9], hidden_dim, hidden_dim // 2)
    return dict(w1=w1, b1=b1, w2=w2, b2=b2, w3=w3, b3=b3,
                tw1=tw1, tb1=tb1, tw2=tw2, tb2=tb2)


def pack_params(p, obs_dim, *, param_dtype=jnp.bfloat16):
    """One-time packing of the 10 raw tensors into a few kernel operands.

    param_dtype=jnp.bfloat16 stores weights (and the wrapper casts activations) in bf16;
    use jnp.float32 if bit-for-bit f32 weight precision is required.
    """
    input_dim = p["w1"].shape[0]
    latent_dim = input_dim - obs_dim
    H = p["w2"].shape[0]
    E = p["w3"].shape[1]
    HH = p["tw2"].shape[1]
    od_pad = _round_up(obs_dim, 8)
    ld_pad = _round_up(latent_dim, 8)

    # Fused layer-1 weight [attention L1 ‖ task T1]; the obs / latent row blocks are each
    # padded to a multiple of 8 rows so the kernel's row split is sublane-aligned.
    w1f = jnp.zeros((od_pad + ld_pad, 2 * H), jnp.float32)
    w1f = w1f.at[:obs_dim, :H].set(p["w1"][:obs_dim])
    w1f = w1f.at[:obs_dim, H:].set(p["tw1"][:obs_dim])
    w1f = w1f.at[od_pad:od_pad + latent_dim, :H].set(p["w1"][obs_dim:])
    w1f = w1f.at[od_pad:od_pad + latent_dim, H:].set(p["tw1"][obs_dim:])

    # Layer 2: for production H (multiple of 128) keep w2 / tw2 separate (two dense,
    # lane-aligned dots); for tiny H pack block-diagonally so one MXU pass does both.
    split_l2 = (H % 128 == 0)

    # All biases in one f32 vector; each segment starts at a 128-lane-aligned offset.
    off_b1 = 0
    off_b2 = _round_up(2 * H, 128)
    off_tb2 = off_b2 + _round_up(H, 128)
    off_b3 = off_tb2 + _round_up(HH, 128)
    total = off_b3 + _round_up(E, 128)
    bias_pack = jnp.zeros((1, total), jnp.float32)
    bias_pack = bias_pack.at[:, off_b1:off_b1 + H].set(p["b1"])
    bias_pack = bias_pack.at[:, off_b1 + H:off_b1 + 2 * H].set(p["tb1"])
    bias_pack = bias_pack.at[:, off_b2:off_b2 + H].set(p["b2"])
    bias_pack = bias_pack.at[:, off_tb2:off_tb2 + HH].set(p["tb2"])
    bias_pack = bias_pack.at[:, off_b3:off_b3 + E].set(p["b3"])

    packed = dict(
        w1_fused=w1f.astype(param_dtype),
        w3=p["w3"].astype(param_dtype),
        bias_pack=bias_pack,  # biases stay f32 (added to f32 accumulators)
        bias_offsets=(off_b1, off_b2, off_tb2, off_b3),
        hidden=H, half_hidden=HH, num_experts=E,
        obs_dim=obs_dim, latent_dim=latent_dim, od_pad=od_pad, ld_pad=ld_pad,
        split_l2=split_l2,
    )
    if split_l2:
        packed["w2"] = p["w2"].astype(param_dtype)
        packed["tw2"] = p["tw2"].astype(param_dtype)
    else:
        w2_block = jnp.concatenate(
            [jnp.concatenate([p["w2"], jnp.zeros((H, HH), jnp.float32)], axis=1),
             jnp.concatenate([jnp.zeros((H, H), jnp.float32), p["tw2"]], axis=1)],
            axis=0)                                                  # [2H, H+HH]
        packed["w2_block"] = w2_block.astype(param_dtype)
    return packed


# --------------------------------------------------------------------------------------
# Pure-JAX references
# --------------------------------------------------------------------------------------
def reference_forward(obs, latent, p):
    """Mirrors the PyTorch module in f32."""
    hp = jax.lax.Precision.HIGHEST
    x = jnp.concatenate([obs, latent], axis=-1)
    h1 = jax.nn.relu(jnp.dot(x, p["w1"], precision=hp) + p["b1"])
    h2 = jax.nn.relu(jnp.dot(h1, p["w2"], precision=hp) + p["b2"])
    logits = jnp.dot(h2, p["w3"], precision=hp) + p["b3"]
    attn = jax.nn.softmax(logits, axis=-1)
    t1 = jax.nn.relu(jnp.dot(x, p["tw1"], precision=hp) + p["tb1"])
    emb = jnp.dot(t1, p["tw2"], precision=hp) + p["tb2"]
    return attn, emb


def reference_forward_matched(obs, latent, p, dtype):
    """Reference applying the same operand rounding as the kernel: weights and matmul
    inputs rounded to `dtype`, accumulation and elementwise math in f32."""
    hp = jax.lax.Precision.HIGHEST
    r = lambda a: a.astype(dtype).astype(jnp.float32)
    x = r(jnp.concatenate([obs, latent], axis=-1))
    h1 = jax.nn.relu(jnp.dot(x, r(p["w1"]), precision=hp) + p["b1"])
    h2 = jax.nn.relu(jnp.dot(r(h1), r(p["w2"]), precision=hp) + p["b2"])
    logits = jnp.dot(r(h2), r(p["w3"]), precision=hp) + p["b3"]
    attn = jax.nn.softmax(logits, axis=-1)
    t1 = jax.nn.relu(jnp.dot(x, r(p["tw1"]), precision=hp) + p["tb1"])
    emb = jnp.dot(r(t1), r(p["tw2"]), precision=hp) + p["tb2"]
    return attn, emb


# --------------------------------------------------------------------------------------
if __name__ == "__main__":
    def run_case(batch, obs_dim, latent_dim, hidden_dim, num_experts):
        key = jax.random.PRNGKey(0)
        k_obs, k_lat, k_par = jax.random.split(key, 3)
        obs = jax.random.normal(k_obs, (batch, obs_dim), jnp.float32)
        latent = jax.random.normal(k_lat, (batch, latent_dim), jnp.float32)
        raw = init_params(k_par, obs_dim + latent_dim, num_experts, hidden_dim)
        packed = pack_params(raw, obs_dim, param_dtype=jnp.bfloat16)

        attn, emb = attention_gating_forward(obs, latent, packed)
        attn, emb = jax.block_until_ready((attn, emb))

        # Module contract.
        assert attn.shape == (batch, num_experts)
        assert emb.shape == (batch, hidden_dim // 2)
        # Exact softmax normalization (plain divide in the kernel).
        assert jnp.allclose(jnp.sum(attn, axis=-1), 1.0, atol=1e-5)

        # Tight check vs a reference that applies the same bf16 operand rounding.
        attn_m, emb_m = reference_forward_matched(obs, latent, raw, jnp.bfloat16)
        assert float(jnp.max(jnp.abs(attn - attn_m))) < 5e-3
        assert float(jnp.max(jnp.abs(emb - emb_m))) < 5e-3
        # Loose sanity check vs the pure-f32 module semantics (absorbs bf16 storage).
        attn_r, emb_r = reference_forward(obs, latent, raw)
        assert float(jnp.max(jnp.abs(attn - attn_r))) < 1e-1
        assert float(jnp.max(jnp.abs(emb - emb_r))) < 1e-1

    # Tiny H -> fused block-diagonal layer-2 path; single grid step.
    run_case(batch=2, obs_dim=16, latent_dim=16, hidden_dim=32, num_experts=8)
    # Module-default H=128 -> split (lane-aligned) layer-2 path; also exercises a
    # non-8-aligned obs_dim, batch padding, and a >=2-step ("parallel") grid.
    run_case(batch=10, obs_dim=12, latent_dim=20, hidden_dim=128, num_experts=8)

    print("KERNEL_OK")
</pallas_src>

<mosaic_0001>
module attributes {stable_mosaic.version = 11 : i64} {
  func.func @kernel(%arg0: i32, %arg1: memref<8x16xbf16, #tpu.memory_space<vmem>>, %arg2: memref<8x16xbf16, #tpu.memory_space<vmem>>, %arg3: memref<32x64xbf16, #tpu.memory_space<vmem>>, %arg4: memref<64x48xbf16, #tpu.memory_space<vmem>>, %arg5: memref<32x8xbf16, #tpu.memory_space<vmem>>, %arg6: memref<1x512xf32, #tpu.memory_space<vmem>>, %arg7: memref<8x24xf32, #tpu.memory_space<vmem>>) attributes {dimension_semantics = [#tpu.dimension_semantics<parallel>], iteration_bounds = array<i64: 1>, scalar_prefetch = 0 : i64, scratch_operands = 0 : i64, tpu.core_type = #tpu.core_type<tc>, window_params = [{transform_indices = @transform_0, window_bounds = array<i64: 8, 16>}, {transform_indices = @transform_1, window_bounds = array<i64: 8, 16>}, {pipeline_mode = #tpu.pipeline_mode<synchronous>, transform_indices = @transform_2, window_bounds = array<i64: 32, 64>}, {pipeline_mode = #tpu.pipeline_mode<synchronous>, transform_indices = @transform_3, window_bounds = array<i64: 64, 48>}, {pipeline_mode = #tpu.pipeline_mode<synchronous>, transform_indices = @transform_4, window_bounds = array<i64: 32, 8>}, {pipeline_mode = #tpu.pipeline_mode<synchronous>, transform_indices = @transform_5, window_bounds = array<i64: 1, 512>}, {transform_indices = @transform_6, window_bounds = array<i64: 8, 24>}]} {
    %c0 = arith.constant 0 : index
    %c0_0 = arith.constant 0 : index
    %0 = vector.load %arg6[%c0, %c0_0] : memref<1x512xf32, #tpu.memory_space<vmem>>, vector<1x64xf32>
    %c0_1 = arith.constant 0 : index
    %c128 = arith.constant 128 : index
    %1 = vector.load %arg6[%c0_1, %c128] : memref<1x512xf32, #tpu.memory_space<vmem>>, vector<1x32xf32>
    %c0_2 = arith.constant 0 : index
    %c256 = arith.constant 256 : index
    %2 = vector.load %arg6[%c0_2, %c256] : memref<1x512xf32, #tpu.memory_space<vmem>>, vector<1x16xf32>
    %c0_3 = arith.constant 0 : index
    %c384 = arith.constant 384 : index
    %3 = vector.load %arg6[%c0_3, %c384] : memref<1x512xf32, #tpu.memory_space<vmem>>, vector<1x8xf32>
    %c0_4 = arith.constant 0 : index
    %c0_5 = arith.constant 0 : index
    %4 = vector.load %arg1[%c0_4, %c0_5] : memref<8x16xbf16, #tpu.memory_space<vmem>>, vector<8x16xbf16>
    %c0_6 = arith.constant 0 : index
    %c0_7 = arith.constant 0 : index
    %5 = vector.load %arg3[%c0_6, %c0_7] : memref<32x64xbf16, #tpu.memory_space<vmem>>, vector<16x64xbf16>
    %cst = arith.constant dense<0.000000e+00> : vector<8x64xf32>
    %6 = tpu.matmul %4, %5, %cst {dimension_numbers = #tpu.dot_dimension_numbers<[1], [0], [0], [1], [0, 0, 1, 1], [], []>} : vector<8x16xbf16>, vector<16x64xbf16>, vector<8x64xf32> -> vector<8x64xf32>
    %c0_8 = arith.constant 0 : index
    %c0_9 = arith.constant 0 : index
    %7 = vector.load %arg2[%c0_8, %c0_9] : memref<8x16xbf16, #tpu.memory_space<vmem>>, vector<8x16xbf16>
    %c16 = arith.constant 16 : index
    %c0_10 = arith.constant 0 : index
    %8 = vector.load %arg3[%c16, %c0_10] : memref<32x64xbf16, #tpu.memory_space<vmem>>, vector<16x64xbf16>
    %cst_11 = arith.constant dense<0.000000e+00> : vector<8x64xf32>
    %9 = tpu.matmul %7, %8, %cst_11 {dimension_numbers = #tpu.dot_dimension_numbers<[1], [0], [0], [1], [0, 0, 1, 1], [], []>} : vector<8x16xbf16>, vector<16x64xbf16>, vector<8x64xf32> -> vector<8x64xf32>
    %10 = arith.addf %6, %9 : vector<8x64xf32>
    %11 = vector.broadcast %0 : vector<1x64xf32> to vector<8x64xf32>
    %12 = arith.addf %10, %11 : vector<8x64xf32>
    %cst_12 = arith.constant 0.000000e+00 : f32
    %13 = vector.broadcast %cst_12 : f32 to vector<8x64xf32>
    %14 = arith.maximumf %12, %13 : vector<8x64xf32>
    %15 = arith.truncf %14 : vector<8x64xf32> to vector<8x64xbf16>
    %c0_13 = arith.constant 0 : index
    %c0_14 = arith.constant 0 : index
    %16 = vector.load %arg4[%c0_13, %c0_14] : memref<64x48xbf16, #tpu.memory_space<vmem>>, vector<64x48xbf16>
    %cst_15 = arith.constant dense<0.000000e+00> : vector<8x48xf32>
    %17 = tpu.matmul %15, %16, %cst_15 {dimension_numbers = #tpu.dot_dimension_numbers<[1], [0], [0], [1], [0, 0, 1, 1], [], []>} : vector<8x64xbf16>, vector<64x48xbf16>, vector<8x48xf32> -> vector<8x48xf32>
    %18 = vector.extract_strided_slice %17 {offsets = [0, 0], sizes = [8, 32], strides = [1, 1]} : vector<8x48xf32> to vector<8x32xf32>
    %19 = vector.broadcast %1 : vector<1x32xf32> to vector<8x32xf32>
    %20 = arith.addf %18, %19 : vector<8x32xf32>
    %cst_16 = arith.constant 0.000000e+00 : f32
    %21 = vector.broadcast %cst_16 : f32 to vector<8x32xf32>
    %22 = arith.maximumf %20, %21 : vector<8x32xf32>
    %23 = vector.extract_strided_slice %17 {offsets = [0, 32], sizes = [8, 16], strides = [1, 1]} : vector<8x48xf32> to vector<8x16xf32>
    %24 = vector.broadcast %2 : vector<1x16xf32> to vector<8x16xf32>
    %25 = arith.addf %23, %24 : vector<8x16xf32>
    %26 = arith.truncf %22 : vector<8x32xf32> to vector<8x32xbf16>
    %c0_17 = arith.constant 0 : index
    %c0_18 = arith.constant 0 : index
    %27 = vector.load %arg5[%c0_17, %c0_18] : memref<32x8xbf16, #tpu.memory_space<vmem>>, vector<32x8xbf16>
    %cst_19 = arith.constant dense<0.000000e+00> : vector<8x8xf32>
    %28 = tpu.matmul %26, %27, %cst_19 {dimension_numbers = #tpu.dot_dimension_numbers<[1], [0], [0], [1], [0, 0, 1, 1], [], []>} : vector<8x32xbf16>, vector<32x8xbf16>, vector<8x8xf32> -> vector<8x8xf32>
    %29 = vector.broadcast %3 : vector<1x8xf32> to vector<8x8xf32>
    %30 = arith.addf %28, %29 : vector<8x8xf32>
    %cst_20 = arith.constant dense<0xFF800000> : vector<8xf32>
    %31 = vector.multi_reduction <maximumf>, %30, %cst_20 [1] : vector<8x8xf32> to vector<8xf32>
    %32 = vector.shape_cast %31 : vector<8xf32> to vector<8x1xf32>
    %33 = vector.broadcast %32 : vector<8x1xf32> to vector<8x8xf32>
    %34 = arith.subf %30, %33 : vector<8x8xf32>
    %35 = math.exp %34 : vector<8x8xf32>
    %cst_21 = arith.constant dense<0.000000e+00> : vector<8xf32>
    %36 = vector.multi_reduction <add>, %35, %cst_21 [1] : vector<8x8xf32> to vector<8xf32>
    %37 = vector.shape_cast %36 : vector<8xf32> to vector<8x1xf32>
    %38 = vector.broadcast %37 : vector<8x1xf32> to vector<8x8xf32>
    %39 = arith.divf %35, %38 : vector<8x8xf32>
    %40 = tpu.concatenate %39, %25 in 1 : vector<8x8xf32>, vector<8x16xf32> -> vector<8x24xf32>
    %c0_22 = arith.constant 0 : index
    %c0_23 = arith.constant 0 : index
    %41 = vector.load %arg7[%c0_22, %c0_23] : memref<8x24xf32, #tpu.memory_space<vmem>>, vector<8x24xf32>
    tpu.vector_store %arg7[%c0_22, %c0_23], %40 {strides = array<i32>} : memref<8x24xf32, #tpu.memory_space<vmem>>, vector<8x24xf32>,
    return
  }
  func.func @transform_0(%arg0: i32) -> (i32, i32) {
    %c0_i32 = arith.constant 0 : i32
    %c0_i32_0 = arith.constant 0 : i32
    return %arg0, %c0_i32 : i32, i32
  }
  func.func @transform_1(%arg0: i32) -> (i32, i32) {
    %c0_i32 = arith.constant 0 : i32
    %c0_i32_0 = arith.constant 0 : i32
    return %arg0, %c0_i32 : i32, i32
  }
  func.func @transform_2(%arg0: i32) -> (i32, i32) {
    %c0_i32 = arith.constant 0 : i32
    %c0_i32_0 = arith.constant 0 : i32
    %c0_i32_1 = arith.constant 0 : i32
    return %c0_i32, %c0_i32_0 : i32, i32
  }
  func.func @transform_3(%arg0: i32) -> (i32, i32) {
    %c0_i32 = arith.constant 0 : i32
    %c0_i32_0 = arith.constant 0 : i32
    %c0_i32_1 = arith.constant 0 : i32
    return %c0_i32, %c0_i32_0 : i32, i32
  }
  func.func @transform_4(%arg0: i32) -> (i32, i32) {
    %c0_i32 = arith.constant 0 : i32
    %c0_i32_0 = arith.constant 0 : i32
    %c0_i32_1 = arith.constant 0 : i32
    return %c0_i32, %c0_i32_0 : i32, i32
  }
  func.func @transform_5(%arg0: i32) -> (i32, i32) {
    %c0_i32 = arith.constant 0 : i32
    %c0_i32_0 = arith.constant 0 : i32
    %c0_i32_1 = arith.constant 0 : i32
    return %c0_i32, %c0_i32_0 : i32, i32
  }
  func.func @transform_6(%arg0: i32) -> (i32, i32) {
    %c0_i32 = arith.constant 0 : i32
    %c0_i32_0 = arith.constant 0 : i32
    return %arg0, %c0_i32 : i32, i32
  }
}

</mosaic_0001>

<llo_original>
// kernel: tpu_custom_call.1
$region0: #{tpu_custom_call.1}
  #allocation0 [shape = 'u32[]', space=smem, size = 0x4, offset = 0x4, fixed_abs, tag = 'smem constant byte address 0x4 - core index']
  #allocation1 [shape = 'u32[144,128]{1,0:T(1,128)}', space=vmem, size = 0x12000, scoped, tag = 'internal scratch']
  %s0 = inlined_call_operand.vmem [shape: bf16[8,16], index: 0, kind: input, shape index: {}]
  %s1 = inlined_call_operand.vmem [shape: bf16[8,16], index: 1, kind: input, shape index: {}]
  %s2 = inlined_call_operand.vmem [shape: bf16[32,64], index: 2, kind: input, shape index: {}]
  %s3 = inlined_call_operand.vmem [shape: bf16[64,48], index: 3, kind: input, shape index: {}]
  %s4 = inlined_call_operand.vmem [shape: bf16[32,8], index: 4, kind: input, shape index: {}]
  %s5 = inlined_call_operand.vmem [shape: f32[1,512], index: 5, kind: input, shape index: {}]
  %s6 = inlined_call_operand.hbm [shape: f32[8,24], index: 6, kind: output, shape index: {}]
  %s7 = sld [smem:[#allocation0]]
  $region34: #{tpu_custom_call.1} parent=0
    _
  %s9 = ssub.s32 1, %s7
  %s10 = scalar_select 0, %s9, %s7
  $region1: #{tpu_custom_call.1} parent=0
    #allocation2 [shape = 'u8[4096]{0}', space=vmem, size = 0x1000, scoped, tag = 'output window, operand 0, single buffered']
    #allocation3 [shape = 's32[1]{0}', space=sflag, size = 0x4, scoped, tag = 'scoped memory for tpu_custom_call.1']
    %11 = vsyncpa [#allocation3], 0
    // Predicated region
    $region2: #{tpu_custom_call.1} parent=1 // pred_check
      _
    $region3: #{tpu_custom_call.1} parent=1 // pred_check_branch
      %13 = sbr.rel (0) target = $region5
    $region4: #{tpu_custom_call.1} parent=1 // pred_region
      _
    $region5: #{tpu_custom_call.1} parent=1 // pred_fallthru
      _
    // Predicated region
    $region6: #{tpu_custom_call.1} parent=1 // pred_check
      _
    $region7: #{tpu_custom_call.1} parent=1 // pred_check_branch
      %15 = sbr.rel (0) target = $region9
    $region8: #{tpu_custom_call.1} parent=1 // pred_region
      _
    $region9: #{tpu_custom_call.1} parent=1 // pred_fallthru
      _
    // Predicated region
    $region10: #{tpu_custom_call.1} parent=1 // pred_check
      _
    $region11: #{tpu_custom_call.1} parent=1 // pred_check_branch
      %17 = sbr.rel (0) target = $region13
    $region12: #{tpu_custom_call.1} parent=1 // pred_region
      _
    $region13: #{tpu_custom_call.1} parent=1 // pred_fallthru
      _
    // Predicated region
    $region14: #{tpu_custom_call.1} parent=1 // pred_check
      _
    $region15: #{tpu_custom_call.1} parent=1 // pred_check_branch
      %19 = sbr.rel (0) target = $region17
    $region16: #{tpu_custom_call.1} parent=1 // pred_region
      _
    $region17: #{tpu_custom_call.1} parent=1 // pred_fallthru
      _
    // Predicated region
    $region18: #{tpu_custom_call.1} parent=1 // pred_check
      _
    $region19: #{tpu_custom_call.1} parent=1 // pred_check_branch
      %21 = sbr.rel (0) target = $region21
    $region20: #{tpu_custom_call.1} parent=1 // pred_region
      _
    $region21: #{tpu_custom_call.1} parent=1 // pred_fallthru
      _
    // Predicated region
    $region22: #{tpu_custom_call.1} parent=1 // pred_check
      _
    $region23: #{tpu_custom_call.1} parent=1 // pred_check_branch
      %23 = sbr.rel (0) target = $region25
    $region24: #{tpu_custom_call.1} parent=1 // pred_region
      _
    $region25: #{tpu_custom_call.1} parent=1 // pred_fallthru
      _
    %v25 = vld [vmem:[%s5] sm:$0x1]
    %v26 = vld [vmem:[%s5 + $0x1] sm:$0x1]
    %v27 = vld [vmem:[%s5 + $0x2] sm:$0x1]
    %v28 = vld [vmem:[%s5 + $0x3] sm:$0x1]
    %v29 = vld [vmem:[%s0] sm:$0xf]
    %v30 = vld [vmem:[%s2] sm:$0xf]
    %v31 = vld [vmem:[%s2 + $0x4] sm:$0xf]
    %v32 = vld [vmem:[%s1] sm:$0xf]
    %v33 = vld [vmem:[%s2 + $0x8] sm:$0xf]
    %v34 = vld [vmem:[%s2 + $0xc] sm:$0xf]
    %v37 = vunpack.c.l.b16 %v33
    %v38 = vunpack.c.l.b16 %v34
    %v39 = vpack.c.b16 %v38, %v37
    %vm41 = vcmask 130048
    %v43 = vsel %vm41, %v32, 0
    %45 = vmatprep.subr.bf16.mxu0 0
    %46 = vmatpush1.bf16.msra.mxu0 %v39
    %47 = vmatprep.subr.bf16.mxu0 0
    %48 = vmatpush1.bf16.msra.mxu0 0
    %49 = vmatprep.subr.bf16.mxu0 0
    %50 = vmatpush1.bf16.msra.mxu0 0
    %51 = vmatprep.subr.bf16.mxu0 0
    %52 = vmatpush1.bf16.msra.mxu0 0
    %53 = vmatprep.subr.bf16.mxu0 0
    %54 = vmatpush1.bf16.msra.mxu0 0
    %55 = vmatprep.subr.bf16.mxu0 0
    %56 = vmatpush1.bf16.msra.mxu0 0
    %57 = vmatprep.subr.bf16.mxu0 0
    %58 = vmatpush1.bf16.msra.mxu0 0
    %59 = vmatprep.subr.bf16.mxu0 0
    %60 = vmatpush1.bf16.msra.mxu0 0
    %61 = vmatprep.subr.bf16.mxu0 0
    %62 = vmatpush1.bf16.msra.mxu0 0
    %63 = vmatprep.subr.bf16.mxu0 0
    %64 = vmatpush1.bf16.msra.mxu0 0
    %65 = vmatprep.subr.bf16.mxu0 0
    %66 = vmatpush1.bf16.msra.mxu0 0
    %67 = vmatprep.subr.bf16.mxu0 0
    %68 = vmatpush1.bf16.msra.mxu0 0
    %69 = vmatprep.subr.bf16.mxu0 0
    %70 = vmatpush1.bf16.msra.mxu0 0
    %71 = vmatprep.subr.bf16.mxu0 0
    %72 = vmatpush1.bf16.msra.mxu0 0
    %73 = vmatprep.subr.bf16.mxu0 0
    %74 = vmatpush1.bf16.msra.mxu0 0
    %75 = vmatprep.subr.bf16.mxu0 0
    %76 = vmatpush1.bf16.msra.mxu0 0
    %77 = vmatprep.mubr.bf16.mxu0 0
    %78 = vmatmul.mubr.bf16.gmra.mrb[0].mxu0 %v43
    %v79 = vpop.f32.mrb[0].mxu0
    %v80 = vadd.f32 0.0, %v79
    %v81 = vpop.f32.mrb[0].mxu0
    %v82 = vpop.f32.mrb[0].mxu0
    %v83 = vpop.f32.mrb[0].mxu0
    %84 = vdwg.mxu0
    %v87 = vunpack.c.l.b16 %v30
    %v88 = vunpack.c.l.b16 %v31
    %v89 = vpack.c.b16 %v88, %v87
    %v92 = vsel %vm41, %v29, 0
    %94 = vmatprep.subr.bf16.mxu0 0
    %95 = vmatpush1.bf16.msra.mxu0 %v89
    %96 = vmatprep.subr.bf16.mxu0 0
    %97 = vmatpush1.bf16.msra.mxu0 0
    %98 = vmatprep.subr.bf16.mxu0 0
    %99 = vmatpush1.bf16.msra.mxu0 0
    %100 = vmatprep.subr.bf16.mxu0 0
    %101 = vmatpush1.bf16.msra.mxu0 0
    %102 = vmatprep.subr.bf16.mxu0 0
    %103 = vmatpush1.bf16.msra.mxu0 0
    %104 = vmatprep.subr.bf16.mxu0 0
    %105 = vmatpush1.bf16.msra.mxu0 0
    %106 = vmatprep.subr.bf16.mxu0 0
    %107 = vmatpush1.bf16.msra.mxu0 0
    %108 = vmatprep.subr.bf16.mxu0 0
    %109 = vmatpush1.bf16.msra.mxu0 0
    %110 = vmatprep.subr.bf16.mxu0 0
    %111 = vmatpush1.bf16.msra.mxu0 0
    %112 = vmatprep.subr.bf16.mxu0 0
    %113 = vmatpush1.bf16.msra.mxu0 0
    %114 = vmatprep.subr.bf16.mxu0 0
    %115 = vmatpush1.bf16.msra.mxu0 0
    %116 = vmatprep.subr.bf16.mxu0 0
    %117 = vmatpush1.bf16.msra.mxu0 0
    %118 = vmatprep.subr.bf16.mxu0 0
    %119 = vmatpush1.bf16.msra.mxu0 0
    %120 = vmatprep.subr.bf16.mxu0 0
    %121 = vmatpush1.bf16.msra.mxu0 0
    %122 = vmatprep.subr.bf16.mxu0 0
    %123 = vmatpush1.bf16.msra.mxu0 0
    %124 = vmatprep.subr.bf16.mxu0 0
    %125 = vmatpush1.bf16.msra.mxu0 0
    %126 = vmatprep.mubr.bf16.mxu0 0
    %127 = vmatmul.mubr.bf16.gmra.mrb[0].mxu0 %v92
    %v128 = vpop.f32.mrb[0].mxu0
    %v129 = vadd.f32 %v80, %v128
    %v130 = vpop.f32.mrb[0].mxu0
    %v131 = vpop.f32.mrb[0].mxu0
    %v132 = vpop.f32.mrb[0].mxu0
    %133 = vdwg.mxu0
    %v135 = vlaneseq
    %v136 = vshrl.u32 %v135, 7
    %v137 = vsub.s32 0, %v136
    %v138 = vrot.slane %v25, %v137
    %v140 = vadd.f32 %v129, %v138
    %v141 = vmax.f32 %v140, 0.0
    %v142 = vpack.c.bf16 %v141, %v141
    %v143 = vld [vmem:[%s3] sm:$0xf]
    %v144 = vld [vmem:[%s3 + $0x4] sm:$0xf]
    %v145 = vld [vmem:[%s3 + $0x8] sm:$0xf]
    %v146 = vld [vmem:[%s3 + $0xc] sm:$0xf]
    %v147 = vld [vmem:[%s3 + $0x10] sm:$0xf]
    %v148 = vld [vmem:[%s3 + $0x14] sm:$0xf]
    %v149 = vld [vmem:[%s3 + $0x18] sm:$0xf]
    %v150 = vld [vmem:[%s3 + $0x1c] sm:$0xf]
    %v159 = vunpack.c.l.b16 %v143
    %v160 = vunpack.c.l.b16 %v144
    %v161 = vunpack.c.l.b16 %v145
    %v162 = vunpack.c.l.b16 %v146
    %v163 = vunpack.c.l.b16 %v147
    %v164 = vunpack.c.l.b16 %v148
    %v165 = vunpack.c.l.b16 %v149
    %v166 = vunpack.c.l.b16 %v150
    %v167 = vpack.c.b16 %v160, %v159
    %v168 = vpack.c.b16 %v162, %v161
    %v169 = vpack.c.b16 %v164, %v163
    %v170 = vpack.c.b16 %v166, %v165
    %vm175 = vcmask 523264
    %v177 = vsel %vm175, %v142, 0
    %179 = vmatprep.subr.bf16.mxu0 0
    %180 = vmatpush1.bf16.msra.mxu0 %v167
    %181 = vmatprep.subr.bf16.mxu0 0
    %182 = vmatpush1.bf16.msra.mxu0 %v168
    %183 = vmatprep.subr.bf16.mxu0 0
    %184 = vmatpush1.bf16.msra.mxu0 %v169
    %185 = vmatprep.subr.bf16.mxu0 0
    %186 = vmatpush1.bf16.msra.mxu0 %v170
    %187 = vmatprep.subr.bf16.mxu0 0
    %188 = vmatpush1.bf16.msra.mxu0 0
    %189 = vmatprep.subr.bf16.mxu0 0
    %190 = vmatpush1.bf16.msra.mxu0 0
    %191 = vmatprep.subr.bf16.mxu0 0
    %192 = vmatpush1.bf16.msra.mxu0 0
    %193 = vmatprep.subr.bf16.mxu0 0
    %194 = vmatpush1.bf16.msra.mxu0 0
    %195 = vmatprep.subr.bf16.mxu0 0
    %196 = vmatpush1.bf16.msra.mxu0 0
    %197 = vmatprep.subr.bf16.mxu0 0
    %198 = vmatpush1.bf16.msra.mxu0 0
    %199 = vmatprep.subr.bf16.mxu0 0
    %200 = vmatpush1.bf16.msra.mxu0 0
    %201 = vmatprep.subr.bf16.mxu0 0
    %202 = vmatpush1.bf16.msra.mxu0 0
    %203 = vmatprep.subr.bf16.mxu0 0
    %204 = vmatpush1.bf16.msra.mxu0 0
    %205 = vmatprep.subr.bf16.mxu0 0
    %206 = vmatpush1.bf16.msra.mxu0 0
    %207 = vmatprep.subr.bf16.mxu0 0
    %208 = vmatpush1.bf16.msra.mxu0 0
    %209 = vmatprep.subr.bf16.mxu0 0
    %210 = vmatpush1.bf16.msra.mxu0 0
    %211 = vmatprep.mubr.bf16.mxu0 0
    %212 = vmatmul.mubr.bf16.gmra.mrb[0].mxu0 %v177
    %v213 = vpop.f32.mrb[0].mxu0
    %v214 = vadd.f32 0.0, %v213
    %v215 = vpop.f32.mrb[0].mxu0
    %v216 = vpop.f32.mrb[0].mxu0
    %v217 = vpop.f32.mrb[0].mxu0
    %218 = vdwg.mxu0
    %v220 = vlaneseq
    %v221 = vshrl.u32 %v220, 7
    %v222 = vsub.s32 0, %v221
    %v223 = vrot.slane %v26, %v222
    %v225 = vadd.f32 %v214, %v223
    %v226 = vmax.f32 %v225, 0.0
    %v228 = vlaneseq
    %v229 = vshrl.u32 %v228, 7
    %v230 = vsub.s32 0, %v229
    %v231 = vrot.slane %v27, %v230
    %232 = vrot.lane.b32.xlu0 %v231, 32
    %v233 = vpop.permute.xlu0 %232
    %v235 = vadd.f32 %v214, %v233
    %v236 = vpack.c.bf16 %v226, %v226
    %v237 = vld [vmem:[%s4] sm:$0xf]
    %v238 = vld [vmem:[%s4 + $0x4] sm:$0xf]
    %v239 = vld [vmem:[%s4 + $0x8] sm:$0xf]
    %v240 = vld [vmem:[%s4 + $0xc] sm:$0xf]
    %v242 = vlaneseq
    %v243 = vshrl.u32 %v242, 7
    %v244 = vsub.s32 0, %v243
    %v245 = vrot.slane %v28, %v244
    %v251 = vunpack.c.l.b16 %v237
    %v252 = vunpack.c.l.b16 %v238
    %v253 = vunpack.c.l.b16 %v239
    %v254 = vunpack.c.l.b16 %v240
    %v255 = vpack.c.b16 %v252, %v251
    %v256 = vpack.c.b16 %v254, %v253
    %vm259 = vcmask 261120
    %v261 = vsel %vm259, %v236, 0
    %263 = vmatprep.subr.bf16.mxu0 0
    %264 = vmatpush1.bf16.msra.mxu0 %v255
    %265 = vmatprep.subr.bf16.mxu0 0
    %266 = vmatpush1.bf16.msra.mxu0 %v256
    %267 = vmatprep.subr.bf16.mxu0 0
    %268 = vmatpush1.bf16.msra.mxu0 0
    %269 = vmatprep.subr.bf16.mxu0 0
    %270 = vmatpush1.bf16.msra.mxu0 0
    %271 = vmatprep.subr.bf16.mxu0 0
    %272 = vmatpush1.bf16.msra.mxu0 0
    %273 = vmatprep.subr.bf16.mxu0 0
    %274 = vmatpush1.bf16.msra.mxu0 0
    %275 = vmatprep.subr.bf16.mxu0 0
    %276 = vmatpush1.bf16.msra.mxu0 0
    %277 = vmatprep.subr.bf16.mxu0 0
    %278 = vmatpush1.bf16.msra.mxu0 0
    %279 = vmatprep.subr.bf16.mxu0 0
    %280 = vmatpush1.bf16.msra.mxu0 0
    %281 = vmatprep.subr.bf16.mxu0 0
    %282 = vmatpush1.bf16.msra.mxu0 0
    %283 = vmatprep.subr.bf16.mxu0 0
    %284 = vmatpush1.bf16.msra.mxu0 0
    %285 = vmatprep.subr.bf16.mxu0 0
    %286 = vmatpush1.bf16.msra.mxu0 0
    %287 = vmatprep.subr.bf16.mxu0 0
    %288 = vmatpush1.bf16.msra.mxu0 0
    %289 = vmatprep.subr.bf16.mxu0 0
    %290 = vmatpush1.bf16.msra.mxu0 0
    %291 = vmatprep.subr.bf16.mxu0 0
    %292 = vmatpush1.bf16.msra.mxu0 0
    %293 = vmatprep.subr.bf16.mxu0 0
    %294 = vmatpush1.bf16.msra.mxu0 0
    %295 = vmatprep.mubr.bf16.mxu0 0
    %296 = vmatmul.mubr.bf16.gmra.mrb[0].mxu0 %v261
    %v297 = vpop.f32.mrb[0].mxu0
    %v298 = vadd.f32 %v245, %v297
    %v299 = vpop.f32.mrb[0].mxu0
    %v300 = vpop.f32.mrb[0].mxu0
    %v301 = vpop.f32.mrb[0].mxu0
    %302 = vdwg.mxu0
    %vm303 = vcmask 64512
    %v304 = vsel %vm303, %v298, -inf
    %305 = vmax.xlane.f32.xlu0 %v304
    %v306 = vpop.xlane.xlu0 %305
    %v307 = vsub.f32 %v298, %v306
    %v308 = vmul.f32 %v307, 1.442695
    %v309 = vpow.pop %v308
    %v310 = vsel %vm303, %v309, 0.0
    %311 = vadd.xlane.f32.xlu0 %v310
    %v312 = vpop.xlane.xlu0 %311
    %v313 = vrcp.pop %v312
    %v314 = vmul.f32 %v309, %v313
    %316 = vrot.lane.b32.xlu0 %v235, 104
    %v317 = vpop.permute.xlu0 %316
    %v319 = vsel %vm303, %v314, %v317
    %vm320 = vcmask 195584
    %321 = vst.msk [vmem:[#allocation2] sm:$0xff] %vm320, %v319
    // Predicated region
    $region26: #{tpu_custom_call.1} parent=1 // pred_check
      _
    $region27: #{tpu_custom_call.1} parent=1 // pred_check_branch
      %323 = sbr.rel (0) target = $region29
    $region28: #{tpu_custom_call.1} parent=1 // pred_region
      %s325 = ssub.s32 128, 128
      %326 = vsyncadd [#allocation3], %s325
      %s328 = sshll.u32 [#allocation2], 4
      %s329 = int_to_ptr.vmem [resolvable:$true] %s328
      %331 = dma.vmem_to_hbm [thread:$0]  %s329, 128, %s6, [#allocation3]
    $region29: #{tpu_custom_call.1} parent=1 // pred_fallthru
      _
    // Predicated region
    $region30: #{tpu_custom_call.1} parent=1 // pred_check
      _
    $region31: #{tpu_custom_call.1} parent=1 // pred_check_branch
      %333 = sbr.rel (0) target = $region33
    $region32: #{tpu_custom_call.1} parent=1 // pred_region
      %334 = dma.done [#allocation3], 128
    $region33: #{tpu_custom_call.1} parent=1 // pred_fallthru
      _
    %335 = vsyncpa [#allocation3], 1

</llo_original>
